<compile_context>
chip_gen: v7x
topology: tpu7x:2x2x1
jax: 0.10.0
libtpu: 0.0.40
codegen_flags: <defaults>
</compile_context>

<pallas_src>
import functools

import jax
import jax.numpy as jnp
from jax import lax
from jax.experimental import pallas as pl
from jax.experimental.pallas import tpu as pltpu


# ----------------------------------------------------------------------------
# Generation-aware sizing helpers
# ----------------------------------------------------------------------------
def _tpu_vmem_bytes():
    try:
        info = pltpu.get_tpu_info()
        v = getattr(info, "vmem_capacity_bytes", None)
        if v:
            return int(v)
    except Exception:
        pass
    return 64 * 1024 * 1024  # conservative default (v7x per-core VMEM)


def _default_block_bytes(vmem_bytes):
    # One pipelined buffer; double-buffered in+out => ~4x this resident.
    # 64 MiB VMEM (v7x) -> 4 MiB blocks; 128 MiB (v5e/v6e) -> 8 MiB blocks.
    return int(min(max(vmem_bytes // 16, 2 * 1024 * 1024), 8 * 1024 * 1024))


def _vmem_limit_bytes(vmem_bytes, block_bytes):
    want = 6 * block_bytes + (4 << 20)  # 2x in + 2x out + bias + slack
    return int(min(max(want, 32 * 1024 * 1024), (vmem_bytes * 3) // 4))


def _round_down(v, m):
    return (v // m) * m


# ----------------------------------------------------------------------------
# batch_first = False : x (L, N, E) -> out (L+1, N, E)
# Flattened view: x2d (L, M), bias_row (1, M), out2d (L+1, M) with M = N*E.
# ----------------------------------------------------------------------------
def _seq_flat_kernel(x_ref, b_ref, o_ref):
    # x (L, tm), b (1, tm), o (L+1, tm): two direct stores, no concat temp.
    L = x_ref.shape[0]
    o_ref[0:L, :] = x_ref[...]
    o_ref[L:L + 1, :] = b_ref[...]


def _seq_tiled_kernel(x_ref, b_ref, o_ref, *, seq_len):
    # Row-tiled path for long L. x/o (tl, tm), b (1, tm).
    tl = o_ref.shape[0]
    row0 = pl.program_id(0) * tl
    rows = row0 + lax.broadcasted_iota(jnp.int32, o_ref.shape, 0)
    # rows >= seq_len -> bias; rows beyond L (output padding) are masked on
    # writeback by the partial-block store, so any padded x data is unused.
    o_ref[...] = jnp.where(rows < seq_len, x_ref[...], b_ref[...])


def sequence_bias_seq_major(x, bias, block_bytes=None):
    L, N, E = x.shape
    M = N * E
    dtype = x.dtype
    itemsize = jnp.dtype(dtype).itemsize

    vmem = _tpu_vmem_bytes()
    if block_bytes is None:
        block_bytes = _default_block_bytes(vmem)
    vmem_limit = _vmem_limit_bytes(vmem, block_bytes)

    x2d = x.reshape(L, M)
    # Bias replicated across the batch once in the wrapper (tiny vs. x for any
    # realistic L); kept (instead of in-kernel tiling) so tm needs no
    # E-divisibility constraint.
    bias_row = jnp.broadcast_to(bias.astype(dtype)[None, :], (N, E)).reshape(1, M)

    cost = pl.CostEstimate(flops=0, transcendentals=0,
                           bytes_accessed=int((2 * L + 2) * M * itemsize))

    tm_min = M if M <= 128 else 128
    rows_fit = max(block_bytes // (tm_min * itemsize), 8)

    if L + 1 <= rows_fit:
        # ---- full-height path: 1-D grid over lanes, two direct stores ----
        tm_budget = max(block_bytes // ((L + 1) * itemsize), tm_min)
        tm = M if tm_budget >= M else max(128, _round_down(tm_budget, 128))
        grid = (pl.cdiv(M, tm),)
        out2d = pl.pallas_call(
            _seq_flat_kernel,
            out_shape=jax.ShapeDtypeStruct((L + 1, M), dtype),
            grid=grid,
            in_specs=[
                pl.BlockSpec((L, tm), lambda j: (0, j)),
                pl.BlockSpec((1, tm), lambda j: (0, j)),
            ],
            out_specs=pl.BlockSpec((L + 1, tm), lambda j: (0, j)),
            compiler_params=pltpu.CompilerParams(
                dimension_semantics=("parallel",),
                vmem_limit_bytes=vmem_limit),
            cost_estimate=cost,
        )(x2d, bias_row)
    else:
        # ---- long sequences: also tile rows so VMEM is independent of L ----
        if M <= 128:
            tm = M
        else:
            tm = min(M, max(128, _round_down(block_bytes // (8 * itemsize), 128)))
        tl = max(8, _round_down(block_bytes // (tm * itemsize), 8))  # 8 <= tl <= L
        nl_in = pl.cdiv(L, tl)
        nl_out = pl.cdiv(L + 1, tl)
        grid = (nl_out, pl.cdiv(M, tm))
        out2d = pl.pallas_call(
            functools.partial(_seq_tiled_kernel, seq_len=L),
            out_shape=jax.ShapeDtypeStruct((L + 1, M), dtype),
            grid=grid,
            in_specs=[
                # Clamp: the (at most one) output row-block past the end of x
                # re-reads the last x block; those values are never selected.
                pl.BlockSpec((tl, tm), lambda i, j: (jnp.minimum(i, nl_in - 1), j)),
                pl.BlockSpec((1, tm), lambda i, j: (0, j)),
            ],
            out_specs=pl.BlockSpec((tl, tm), lambda i, j: (i, j)),
            compiler_params=pltpu.CompilerParams(
                dimension_semantics=("parallel", "parallel"),
                vmem_limit_bytes=vmem_limit),
            cost_estimate=cost,
        )(x2d, bias_row)

    return out2d.reshape(L + 1, N, E)


# ----------------------------------------------------------------------------
# batch_first = True : x (N, L, E) -> out (N, L+1, E)
# ----------------------------------------------------------------------------
def _batch_flat_kernel(x_ref, b_ref, o_ref):
    # x (tb, L*E), b (1, E), o (tb, (L+1)*E): bulk copy + tiny bias store.
    tb, w_in = x_ref.shape
    e = b_ref.shape[1]
    o_ref[:, 0:w_in] = x_ref[...]
    o_ref[:, w_in:w_in + e] = jnp.broadcast_to(b_ref[...], (tb, e))


def _batch_tiled_kernel(x_ref, b_ref, o_ref, *, seq_len):
    # Sequence-tiled path. x/o (tb, tl, E), b (1, 1, E); seq block = grid axis 1.
    _, tl, e = o_ref.shape
    row0 = pl.program_id(1) * tl
    rows = row0 + lax.broadcasted_iota(jnp.int32, (tl, e), 0)
    o_ref[...] = jnp.where(rows[None, :, :] < seq_len, x_ref[...], b_ref[...])


def sequence_bias_batch_major(x, bias, block_bytes=None):
    N, L, E = x.shape
    dtype = x.dtype
    itemsize = jnp.dtype(dtype).itemsize
    w_in, w_out = L * E, (L + 1) * E

    vmem = _tpu_vmem_bytes()
    if block_bytes is None:
        block_bytes = _default_block_bytes(vmem)
    vmem_limit = _vmem_limit_bytes(vmem, block_bytes)

    bias = bias.astype(dtype)
    cost = pl.CostEstimate(flops=0, transcendentals=0,
                           bytes_accessed=int((2 * L + 2) * N * E * itemsize))

    fits_flat = (min(N, 8) * w_out * itemsize <= block_bytes) or (L + 1 <= 8)
    if fits_flat:
        # ---- lane-dense flattened path: 1-D grid over batch blocks ----
        x2d = x.reshape(N, w_in)
        bias2d = bias.reshape(1, E)
        tb_budget = max(block_bytes // (w_out * itemsize), 1)
        if tb_budget >= N or N <= 8:
            tb = N
        else:
            tb = max(8, _round_down(tb_budget, 8))
        grid = (pl.cdiv(N, tb),)
        out2d = pl.pallas_call(
            _batch_flat_kernel,
            out_shape=jax.ShapeDtypeStruct((N, w_out), dtype),
            grid=grid,
            in_specs=[
                pl.BlockSpec((tb, w_in), lambda i: (i, 0)),
                pl.BlockSpec((1, E), lambda i: (0, 0)),
            ],
            out_specs=pl.BlockSpec((tb, w_out), lambda i: (i, 0)),
            compiler_params=pltpu.CompilerParams(
                dimension_semantics=("parallel",),
                vmem_limit_bytes=vmem_limit),
            cost_estimate=cost,
        )(x2d, bias2d)
        return out2d.reshape(N, L + 1, E)

    # ---- large L*E: tile the sequence axis (3-D blocks, VMEM independent of L) ----
    bias3d = bias.reshape(1, 1, E)
    tl = min(_round_down(L, 8),
             max(8, _round_down(block_bytes // (E * itemsize), 8)))
    tb = max(1, min(N, block_bytes // (tl * E * itemsize)))
    nl_in = pl.cdiv(L, tl)
    nl_out = pl.cdiv(L + 1, tl)
    grid = (pl.cdiv(N, tb), nl_out)
    out = pl.pallas_call(
        functools.partial(_batch_tiled_kernel, seq_len=L),
        out_shape=jax.ShapeDtypeStruct((N, L + 1, E), dtype),
        grid=grid,
        in_specs=[
            pl.BlockSpec((tb, tl, E),
                         lambda b, l: (b, jnp.minimum(l, nl_in - 1), 0)),
            pl.BlockSpec((1, 1, E), lambda b, l: (0, 0, 0)),
        ],
        out_specs=pl.BlockSpec((tb, tl, E), lambda b, l: (b, l, 0)),
        compiler_params=pltpu.CompilerParams(
            dimension_semantics=("parallel", "parallel"),
            vmem_limit_bytes=vmem_limit),
        cost_estimate=cost,
    )(x, bias3d)
    return out


def sequence_bias(x, bias, batch_first=False, block_bytes=None):
    """Pallas-TPU forward of opacus SequenceBias."""
    if batch_first:
        return sequence_bias_batch_major(x, bias, block_bytes)
    return sequence_bias_seq_major(x, bias, block_bytes)


# ----------------------------------------------------------------------------
# Pure-JAX references
# ----------------------------------------------------------------------------
def _ref_seq_major(x, bias):
    L, N, E = x.shape
    b = jnp.broadcast_to(bias.astype(x.dtype)[None, None, :], (1, N, E))
    return jnp.concatenate([x, b], axis=0)


def _ref_batch_major(x, bias):
    N, L, E = x.shape
    b = jnp.broadcast_to(bias.astype(x.dtype)[None, None, :], (N, 1, E))
    return jnp.concatenate([x, b], axis=1)


if __name__ == "__main__":
    key = jax.random.PRNGKey(0)
    ks = jax.random.split(key, 9)

    # --- primary small test (module example scale), default budgets ---
    L, N, E = 8, 4, 32
    bias = jax.random.normal(ks[0], (E,), dtype=jnp.float32)

    x = jax.random.normal(ks[1], (L, N, E), dtype=jnp.float32)
    out = jax.block_until_ready(sequence_bias(x, bias, batch_first=False))
    assert out.shape == (L + 1, N, E)
    assert jnp.allclose(out, _ref_seq_major(x, bias)), "seq-major mismatch"

    x2 = jax.random.normal(ks[2], (N, L, E), dtype=jnp.float32)
    out2 = jax.block_until_ready(sequence_bias(x2, bias, batch_first=True))
    assert out2.shape == (N, L + 1, E)
    assert jnp.allclose(out2, _ref_batch_major(x2, bias)), "batch-major mismatch"

    # --- tiny block budgets to exercise the row-tiled / multi-block paths ---
    bias64 = jax.random.normal(ks[3], (64,), dtype=jnp.float32)
    bias48 = jax.random.normal(ks[4], (48,), dtype=jnp.float32)

    # seq-major, row-tiled, L % tl == 0 (degenerate extra output row-block)
    x3 = jax.random.normal(ks[5], (24, 2, 64), dtype=jnp.float32)
    out3 = jax.block_until_ready(
        sequence_bias(x3, bias64, batch_first=False, block_bytes=4096))
    assert jnp.allclose(out3, _ref_seq_major(x3, bias64)), "seq tiled (L%tl==0)"

    # seq-major, row-tiled, L % tl != 0 (padded last input block)
    x4 = jax.random.normal(ks[6], (20, 2, 64), dtype=jnp.float32)
    out4 = jax.block_until_ready(
        sequence_bias(x4, bias64, batch_first=False, block_bytes=4096))
    assert jnp.allclose(out4, _ref_seq_major(x4, bias64)), "seq tiled (L%tl!=0)"

    # batch-major, sequence-tiled 3-D path
    x5 = jax.random.normal(ks[7], (4, 12, 64), dtype=jnp.float32)
    out5 = jax.block_until_ready(
        sequence_bias(x5, bias64, batch_first=True, block_bytes=4096))
    assert jnp.allclose(out5, _ref_batch_major(x5, bias64)), "batch tiled"

    # batch-major, flat path with multiple / partial batch blocks (tb=8, N=12)
    x6 = jax.random.normal(ks[8], (12, 8, 64), dtype=jnp.float32)
    out6 = jax.block_until_ready(
        sequence_bias(x6, bias64, batch_first=True, block_bytes=20480))
    assert jnp.allclose(out6, _ref_batch_major(x6, bias64)), "batch flat tiled"

    # seq-major, flat path with multiple / partial lane blocks (M=192, tm=128)
    x7 = jax.random.normal(ks[1], (8, 4, 48), dtype=jnp.float32)
    out7 = jax.block_until_ready(
        sequence_bias(x7, bias48, batch_first=False, block_bytes=6144))
    assert jnp.allclose(out7, _ref_seq_major(x7, bias48)), "seq flat lane-tiled"

    print("KERNEL_OK")
</pallas_src>

<mosaic_0001>
module attributes {stable_mosaic.version = 11 : i64} {
  func.func @_seq_flat_kernel(%arg0: i32, %arg1: memref<8x128xf32, #tpu.memory_space<vmem>>, %arg2: memref<1x128xf32, #tpu.memory_space<vmem>>, %arg3: memref<9x128xf32, #tpu.memory_space<vmem>>) attributes {dimension_semantics = [#tpu.dimension_semantics<parallel>], iteration_bounds = array<i64: 1>, scalar_prefetch = 0 : i64, scratch_operands = 0 : i64, tpu.core_type = #tpu.core_type<tc>, window_params = [{transform_indices = @transform_0, window_bounds = array<i64: 8, 128>}, {transform_indices = @transform_1, window_bounds = array<i64: 1, 128>}, {transform_indices = @transform_2, window_bounds = array<i64: 9, 128>}]} {
    %c0 = arith.constant 0 : index
    %c0_0 = arith.constant 0 : index
    %0 = vector.load %arg1[%c0, %c0_0] : memref<8x128xf32, #tpu.memory_space<vmem>>, vector<8x128xf32>
    %c0_1 = arith.constant 0 : index
    %c0_2 = arith.constant 0 : index
    %1 = vector.load %arg3[%c0_1, %c0_2] : memref<9x128xf32, #tpu.memory_space<vmem>>, vector<8x128xf32>
    tpu.vector_store %arg3[%c0_1, %c0_2], %0 {strides = array<i32>} : memref<9x128xf32, #tpu.memory_space<vmem>>, vector<8x128xf32>,
    %c0_3 = arith.constant 0 : index
    %c0_4 = arith.constant 0 : index
    %2 = vector.load %arg2[%c0_3, %c0_4] : memref<1x128xf32, #tpu.memory_space<vmem>>, vector<1x128xf32>
    %c8 = arith.constant 8 : index
    %c0_5 = arith.constant 0 : index
    %3 = vector.load %arg3[%c8, %c0_5] : memref<9x128xf32, #tpu.memory_space<vmem>>, vector<1x128xf32>
    tpu.vector_store %arg3[%c8, %c0_5], %2 {strides = array<i32>} : memref<9x128xf32, #tpu.memory_space<vmem>>, vector<1x128xf32>,
    return
  }
  func.func @transform_0(%arg0: i32) -> (i32, i32) {
    %c0_i32 = arith.constant 0 : i32
    %c0_i32_0 = arith.constant 0 : i32
    return %c0_i32, %arg0 : i32, i32
  }
  func.func @transform_1(%arg0: i32) -> (i32, i32) {
    %c0_i32 = arith.constant 0 : i32
    %c0_i32_0 = arith.constant 0 : i32
    return %c0_i32, %arg0 : i32, i32
  }
  func.func @transform_2(%arg0: i32) -> (i32, i32) {
    %c0_i32 = arith.constant 0 : i32
    %c0_i32_0 = arith.constant 0 : i32
    return %c0_i32, %arg0 : i32, i32
  }
}

</mosaic_0001>

<llo_original>
// kernel: tpu_custom_call.1
$region0: #{tpu_custom_call.1}
  #allocation0 [shape = 'u32[]', space=smem, size = 0x4, offset = 0x4, fixed_abs, tag = 'smem constant byte address 0x4 - core index']
  #allocation1 [shape = 'u32[144,128]{1,0:T(1,128)}', space=vmem, size = 0x12000, scoped, tag = 'internal scratch']
  %s0 = inlined_call_operand.hbm [shape: f32[8,128], index: 0, kind: input, shape index: {}]
  %s1 = inlined_call_operand.vmem [shape: f32[1,128], index: 1, kind: input, shape index: {}]
  %s2 = inlined_call_operand.hbm [shape: f32[9,128], index: 2, kind: output, shape index: {}]
  %s3 = sld [smem:[#allocation0]]
  $region22: #{tpu_custom_call.1} parent=0
    _
  %s5 = ssub.s32 1, %s3
  %s6 = scalar_select 0, %s5, %s3
  $region1: #{tpu_custom_call.1} parent=0
    #allocation2 [shape = 'u8[4096]{0}', space=vmem, size = 0x1000, scoped, tag = 'input window, operand 0, single buffered']
    #allocation3 [shape = 's32[1]{0}', space=sflag, size = 0x4, scoped, tag = 'scoped memory for tpu_custom_call.1']
    #allocation4 [shape = 's32[1]{0}', space=sflag, size = 0x4, scoped, tag = 'scoped memory for tpu_custom_call.1']
    #allocation5 [shape = 'u8[8192]{0}', space=vmem, size = 0x2000, scoped, tag = 'output window, operand 0, single buffered']
    %7 = vsyncpa [#allocation3], 0
    %8 = vsyncpa [#allocation4], 0
    // Predicated region
    $region2: #{tpu_custom_call.1} parent=1 // pred_check
      _
    $region3: #{tpu_custom_call.1} parent=1 // pred_check_branch
      %10 = sbr.rel (0) target = $region5
    $region4: #{tpu_custom_call.1} parent=1 // pred_region
      %s12 = ssub.s32 128, 128
      %13 = vsyncadd [#allocation3], %s12
      %s15 = sshll.u32 [#allocation2], 4
      %s16 = int_to_ptr.vmem [resolvable:$true] %s15
      %18 = dma.hbm_to_vmem [thread:$0]  %s0, 128, %s16, [#allocation3]
    $region5: #{tpu_custom_call.1} parent=1 // pred_fallthru
      _
    // Predicated region
    $region6: #{tpu_custom_call.1} parent=1 // pred_check
      _
    $region7: #{tpu_custom_call.1} parent=1 // pred_check_branch
      %20 = sbr.rel (0) target = $region9
    $region8: #{tpu_custom_call.1} parent=1 // pred_region
      _
    $region9: #{tpu_custom_call.1} parent=1 // pred_fallthru
      _
    // Predicated region
    $region10: #{tpu_custom_call.1} parent=1 // pred_check
      _
    $region11: #{tpu_custom_call.1} parent=1 // pred_check_branch
      %22 = sbr.rel (0) target = $region13
    $region12: #{tpu_custom_call.1} parent=1 // pred_region
      %23 = dma.done [#allocation3], 128
    $region13: #{tpu_custom_call.1} parent=1 // pred_fallthru
      _
    %v24 = vld [vmem:[#allocation2] sm:$0xff]
    %25 = vst [vmem:[#allocation5] sm:$0xff] %v24
    %v26 = vld [vmem:[%s1] sm:$0x1]
    %27 = vst [vmem:[#allocation5 + $0x8] sm:$0x1] %v26
    // Predicated region
    $region14: #{tpu_custom_call.1} parent=1 // pred_check
      _
    $region15: #{tpu_custom_call.1} parent=1 // pred_check_branch
      %29 = sbr.rel (0) target = $region17
    $region16: #{tpu_custom_call.1} parent=1 // pred_region
      %s31 = ssub.s32 256, 256
      %32 = vsyncadd [#allocation4], %s31
      %s33 = sshll.u32 [#allocation5], 4
      %s34 = int_to_ptr.vmem [resolvable:$true] %s33
      %39 = dma.vmem_to_hbm [thread:$0]  %s34, 256, %s2, [#allocation4], 128, 128, 8
    $region17: #{tpu_custom_call.1} parent=1 // pred_fallthru
      _
    // Predicated region
    $region18: #{tpu_custom_call.1} parent=1 // pred_check
      _
    $region19: #{tpu_custom_call.1} parent=1 // pred_check_branch
      %41 = sbr.rel (0) target = $region21
    $region20: #{tpu_custom_call.1} parent=1 // pred_region
      %42 = dma.done [#allocation4], 256
    $region21: #{tpu_custom_call.1} parent=1 // pred_fallthru
      _
    %43 = vsyncpa [#allocation3], 1
    %44 = vsyncpa [#allocation4], 1

</llo_original>
